<compile_context>
chip_gen: v6e
topology: v6e:2x2x1
jax: 0.10.0
libtpu: 0.0.40
codegen_flags: <defaults>
</compile_context>

<pallas_src>
import jax
import jax.numpy as jnp
from jax.experimental import pallas as pl
from jax.experimental.pallas import tpu as pltpu


_BLOCK_BUDGET_BYTES = 4 * 1024 * 1024  # ~1-4 MiB blocks reach the HBM roofline


def total_variation(adv_patch: jax.Array, *,
                    block_budget_bytes: int = _BLOCK_BUDGET_BYTES) -> jax.Array:
    """Pallas TPU implementation of TotalVariation.forward.

    adv_patch: (C, H, W) float array. Returns a float32 scalar.
    """
    c, h, w = adv_patch.shape
    numel = c * h * w
    itemsize = jnp.dtype(adv_patch.dtype).itemsize
    slab_bytes = h * w * itemsize

    # Channels per grid step: largest divisor of C whose block fits the budget
    # (falls back to 1 channel per step for very large spatial sizes).
    cb = 1
    for d in range(c, 0, -1):
        if c % d == 0 and d * slab_bytes <= block_budget_bytes:
            cb = d
            break
    steps = c // cb

    def kernel(x_ref, out_ref, acc_ref, cw_ref, ch_ref):
        step = pl.program_id(0)

        @pl.when(step == 0)
        def _init():
            acc_ref[...] = jnp.zeros_like(acc_ref)
            cw_ref[...] = jnp.zeros_like(cw_ref)
            ch_ref[...] = jnp.zeros_like(ch_ref)

        # Static unroll over the channels in this block.
        for ci in range(cb):
            x = x_ref[ci].astype(jnp.float32)            # (H, W)
            # roll(x, n-1, axis) puts element (j+1) % n at position j, so the
            # full tile holds x[.., j+1] - x[.., j] + eps; the wrap-around
            # term (x[.., 0] - x[.., n-1] + eps) lands in the last col / row.
            dw = jnp.abs(pltpu.roll(x, shift=w - 1, axis=1) - x + 1e-6)
            dh = jnp.abs(pltpu.roll(x, shift=h - 1, axis=0) - x + 1e-6)
            # Elementwise accumulation only -- no reduce on the per-step path.
            acc_ref[...] += dw + dh
            # Seam corrections (the wrap terms above): O(H + W) work instead
            # of whole-tile iota/compare/select masking.
            cw_ref[...] += dw[:, w - 1:w]                 # (H, 1)
            ch_ref[...] += dh[h - 1:h, :]                 # (1, W)

        @pl.when(step == pl.num_programs(0) - 1)
        def _finalize():
            total = (jnp.sum(acc_ref[...])
                     - jnp.sum(cw_ref[...])
                     - jnp.sum(ch_ref[...]))
            out_ref[0, 0] = total / numel

    grid_spec = pltpu.PrefetchScalarGridSpec(
        num_scalar_prefetch=0,
        grid=(steps,),
        in_specs=[
            pl.BlockSpec((cb, h, w), lambda i: (i, 0, 0),
                         memory_space=pltpu.VMEM),
        ],
        out_specs=pl.BlockSpec(memory_space=pltpu.SMEM),
        scratch_shapes=[
            pltpu.VMEM((h, w), jnp.float32),   # elementwise accumulator
            pltpu.VMEM((h, 1), jnp.float32),   # width-seam correction
            pltpu.VMEM((1, w), jnp.float32),   # height-seam correction
        ],
    )

    # Raise the scoped VMEM limit only when a block actually needs it; stay
    # below v7x's 64 MiB physical VMEM.
    vmem_needed = 2 * cb * slab_bytes + (h * w + h + w) * 4 + (1 << 20)
    compiler_kwargs = dict(dimension_semantics=("arbitrary",))
    if vmem_needed > (32 << 20):
        compiler_kwargs["vmem_limit_bytes"] = int(min(vmem_needed, 60 << 20))

    out = pl.pallas_call(
        kernel,
        out_shape=jax.ShapeDtypeStruct((1, 1), jnp.float32),
        grid_spec=grid_spec,
        compiler_params=pltpu.CompilerParams(**compiler_kwargs),
    )(adv_patch)
    return out[0, 0]


def total_variation_ref(adv_patch: jax.Array) -> jax.Array:
    """Pure-JAX reference mirroring the PyTorch module exactly."""
    x = adv_patch.astype(jnp.float32)
    tvcomp1 = jnp.sum(jnp.abs(x[:, :, 1:] - x[:, :, :-1] + 1e-6))
    tvcomp2 = jnp.sum(jnp.abs(x[:, 1:, :] - x[:, :-1, :] + 1e-6))
    return (tvcomp1 + tvcomp2) / x.size


if __name__ == "__main__":
    key = jax.random.PRNGKey(0)
    # Small patch consistent with the module: channels=4, spatial=16x16.
    adv_patch = jax.random.uniform(key, (4, 16, 16), dtype=jnp.float32)

    tv_ref = total_variation_ref(adv_patch)

    # Single-block fast path (whole patch in one VMEM block, grid of 1).
    tv = jax.block_until_ready(total_variation(adv_patch))
    assert jnp.allclose(tv, tv_ref, rtol=1e-5, atol=1e-6), (tv, tv_ref)

    # Multi-step accumulator path (force 1 channel per block) -- exercises the
    # init / elementwise-accumulate / finalize structure used for large patches.
    tv_tiled = jax.block_until_ready(
        total_variation(adv_patch, block_budget_bytes=16 * 16 * 4))
    assert jnp.allclose(tv_tiled, tv_ref, rtol=1e-5, atol=1e-6), (tv_tiled, tv_ref)

    print("KERNEL_OK")
</pallas_src>

<mosaic_0001>
module attributes {stable_mosaic.version = 11 : i64} {
  func.func @kernel(%arg0: i32, %arg1: memref<4x16x16xf32, #tpu.memory_space<vmem>>, %arg2: memref<1x1xf32, #tpu.memory_space<smem>>, %arg3: memref<16x16xf32, #tpu.memory_space<vmem>>, %arg4: memref<16x1xf32, #tpu.memory_space<vmem>>, %arg5: memref<1x16xf32, #tpu.memory_space<vmem>>) attributes {dimension_semantics = [#tpu.dimension_semantics<arbitrary>], iteration_bounds = array<i64: 1>, scalar_prefetch = 0 : i64, scratch_operands = 3 : i64, tpu.core_type = #tpu.core_type<tc>, window_params = [{transform_indices = @transform_0, window_bounds = array<i64: 4, 16, 16>}, {transform_indices = @transform_1, window_bounds = array<i64: 1, 1>}]} {
    %c0_i32 = arith.constant 0 : i32
    %0 = arith.cmpi eq, %arg0, %c0_i32 : i32
    %1 = arith.extui %0 : i1 to i32
    %c0_i32_0 = arith.constant 0 : i32
    %2 = arith.cmpi ne, %1, %c0_i32_0 : i32
    scf.if %2 {
      %cst_73 = arith.constant 0.000000e+00 : f32
      %102 = vector.broadcast %cst_73 : f32 to vector<16x16xf32>
      %c0_74 = arith.constant 0 : index
      %c0_75 = arith.constant 0 : index
      %103 = vector.load %arg3[%c0_74, %c0_75] : memref<16x16xf32, #tpu.memory_space<vmem>>, vector<16x16xf32>
      tpu.vector_store %arg3[%c0_74, %c0_75], %102 {strides = array<i32>} : memref<16x16xf32, #tpu.memory_space<vmem>>, vector<16x16xf32>,
      %cst_76 = arith.constant 0.000000e+00 : f32
      %104 = vector.broadcast %cst_76 : f32 to vector<16x1xf32>
      %c0_77 = arith.constant 0 : index
      %c0_78 = arith.constant 0 : index
      %105 = vector.load %arg4[%c0_77, %c0_78] : memref<16x1xf32, #tpu.memory_space<vmem>>, vector<16x1xf32>
      tpu.vector_store %arg4[%c0_77, %c0_78], %104 {strides = array<i32>} : memref<16x1xf32, #tpu.memory_space<vmem>>, vector<16x1xf32>,
      %cst_79 = arith.constant 0.000000e+00 : f32
      %106 = vector.broadcast %cst_79 : f32 to vector<1x16xf32>
      %c0_80 = arith.constant 0 : index
      %c0_81 = arith.constant 0 : index
      %107 = vector.load %arg5[%c0_80, %c0_81] : memref<1x16xf32, #tpu.memory_space<vmem>>, vector<1x16xf32>
      tpu.vector_store %arg5[%c0_80, %c0_81], %106 {strides = array<i32>} : memref<1x16xf32, #tpu.memory_space<vmem>>, vector<1x16xf32>,
    } else {
    }
    %c0 = arith.constant 0 : index
    %c0_1 = arith.constant 0 : index
    %c0_2 = arith.constant 0 : index
    %3 = vector.load %arg1[%c0, %c0_1, %c0_2] : memref<4x16x16xf32, #tpu.memory_space<vmem>>, vector<1x16x16xf32>
    %4 = vector.shape_cast %3 : vector<1x16x16xf32> to vector<16x16xf32>
    %c15_i32 = arith.constant 15 : i32
    %5 = tpu.dynamic_rotate %4 by %c15_i32 dim 1 : vector<16x16xf32>, i32 -> vector<16x16xf32>
    %6 = arith.subf %5, %4 : vector<16x16xf32>
    %cst = arith.constant 9.99999997E-7 : f32
    %7 = vector.broadcast %cst : f32 to vector<16x16xf32>
    %8 = arith.addf %6, %7 : vector<16x16xf32>
    %9 = math.absf %8 : vector<16x16xf32>
    %c15_i32_3 = arith.constant 15 : i32
    %10 = tpu.dynamic_rotate %4 by %c15_i32_3 dim 0 : vector<16x16xf32>, i32 -> vector<16x16xf32>
    %11 = arith.subf %10, %4 : vector<16x16xf32>
    %cst_4 = arith.constant 9.99999997E-7 : f32
    %12 = vector.broadcast %cst_4 : f32 to vector<16x16xf32>
    %13 = arith.addf %11, %12 : vector<16x16xf32>
    %14 = math.absf %13 : vector<16x16xf32>
    %c0_5 = arith.constant 0 : index
    %c0_6 = arith.constant 0 : index
    %15 = vector.load %arg3[%c0_5, %c0_6] : memref<16x16xf32, #tpu.memory_space<vmem>>, vector<16x16xf32>
    %16 = arith.addf %9, %14 : vector<16x16xf32>
    %17 = arith.addf %15, %16 : vector<16x16xf32>
    %c0_7 = arith.constant 0 : index
    %c0_8 = arith.constant 0 : index
    %18 = vector.load %arg3[%c0_7, %c0_8] : memref<16x16xf32, #tpu.memory_space<vmem>>, vector<16x16xf32>
    tpu.vector_store %arg3[%c0_7, %c0_8], %17 {strides = array<i32>} : memref<16x16xf32, #tpu.memory_space<vmem>>, vector<16x16xf32>,
    %c0_9 = arith.constant 0 : index
    %c0_10 = arith.constant 0 : index
    %19 = vector.load %arg4[%c0_9, %c0_10] : memref<16x1xf32, #tpu.memory_space<vmem>>, vector<16x1xf32>
    %20 = vector.extract_strided_slice %9 {offsets = [0, 15], sizes = [16, 1], strides = [1, 1]} : vector<16x16xf32> to vector<16x1xf32>
    %21 = arith.addf %19, %20 : vector<16x1xf32>
    %c0_11 = arith.constant 0 : index
    %c0_12 = arith.constant 0 : index
    %22 = vector.load %arg4[%c0_11, %c0_12] : memref<16x1xf32, #tpu.memory_space<vmem>>, vector<16x1xf32>
    tpu.vector_store %arg4[%c0_11, %c0_12], %21 {strides = array<i32>} : memref<16x1xf32, #tpu.memory_space<vmem>>, vector<16x1xf32>,
    %c0_13 = arith.constant 0 : index
    %c0_14 = arith.constant 0 : index
    %23 = vector.load %arg5[%c0_13, %c0_14] : memref<1x16xf32, #tpu.memory_space<vmem>>, vector<1x16xf32>
    %24 = vector.extract_strided_slice %14 {offsets = [15, 0], sizes = [1, 16], strides = [1, 1]} : vector<16x16xf32> to vector<1x16xf32>
    %25 = arith.addf %23, %24 : vector<1x16xf32>
    %c0_15 = arith.constant 0 : index
    %c0_16 = arith.constant 0 : index
    %26 = vector.load %arg5[%c0_15, %c0_16] : memref<1x16xf32, #tpu.memory_space<vmem>>, vector<1x16xf32>
    tpu.vector_store %arg5[%c0_15, %c0_16], %25 {strides = array<i32>} : memref<1x16xf32, #tpu.memory_space<vmem>>, vector<1x16xf32>,
    %c1 = arith.constant 1 : index
    %c0_17 = arith.constant 0 : index
    %c0_18 = arith.constant 0 : index
    %27 = vector.load %arg1[%c1, %c0_17, %c0_18] : memref<4x16x16xf32, #tpu.memory_space<vmem>>, vector<1x16x16xf32>
    %28 = vector.shape_cast %27 : vector<1x16x16xf32> to vector<16x16xf32>
    %c15_i32_19 = arith.constant 15 : i32
    %29 = tpu.dynamic_rotate %28 by %c15_i32_19 dim 1 : vector<16x16xf32>, i32 -> vector<16x16xf32>
    %30 = arith.subf %29, %28 : vector<16x16xf32>
    %cst_20 = arith.constant 9.99999997E-7 : f32
    %31 = vector.broadcast %cst_20 : f32 to vector<16x16xf32>
    %32 = arith.addf %30, %31 : vector<16x16xf32>
    %33 = math.absf %32 : vector<16x16xf32>
    %c15_i32_21 = arith.constant 15 : i32
    %34 = tpu.dynamic_rotate %28 by %c15_i32_21 dim 0 : vector<16x16xf32>, i32 -> vector<16x16xf32>
    %35 = arith.subf %34, %28 : vector<16x16xf32>
    %cst_22 = arith.constant 9.99999997E-7 : f32
    %36 = vector.broadcast %cst_22 : f32 to vector<16x16xf32>
    %37 = arith.addf %35, %36 : vector<16x16xf32>
    %38 = math.absf %37 : vector<16x16xf32>
    %c0_23 = arith.constant 0 : index
    %c0_24 = arith.constant 0 : index
    %39 = vector.load %arg3[%c0_23, %c0_24] : memref<16x16xf32, #tpu.memory_space<vmem>>, vector<16x16xf32>
    %40 = arith.addf %33, %38 : vector<16x16xf32>
    %41 = arith.addf %39, %40 : vector<16x16xf32>
    %c0_25 = arith.constant 0 : index
    %c0_26 = arith.constant 0 : index
    %42 = vector.load %arg3[%c0_25, %c0_26] : memref<16x16xf32, #tpu.memory_space<vmem>>, vector<16x16xf32>
    tpu.vector_store %arg3[%c0_25, %c0_26], %41 {strides = array<i32>} : memref<16x16xf32, #tpu.memory_space<vmem>>, vector<16x16xf32>,
    %c0_27 = arith.constant 0 : index
    %c0_28 = arith.constant 0 : index
    %43 = vector.load %arg4[%c0_27, %c0_28] : memref<16x1xf32, #tpu.memory_space<vmem>>, vector<16x1xf32>
    %44 = vector.extract_strided_slice %33 {offsets = [0, 15], sizes = [16, 1], strides = [1, 1]} : vector<16x16xf32> to vector<16x1xf32>
    %45 = arith.addf %43, %44 : vector<16x1xf32>
    %c0_29 = arith.constant 0 : index
    %c0_30 = arith.constant 0 : index
    %46 = vector.load %arg4[%c0_29, %c0_30] : memref<16x1xf32, #tpu.memory_space<vmem>>, vector<16x1xf32>
    tpu.vector_store %arg4[%c0_29, %c0_30], %45 {strides = array<i32>} : memref<16x1xf32, #tpu.memory_space<vmem>>, vector<16x1xf32>,
    %c0_31 = arith.constant 0 : index
    %c0_32 = arith.constant 0 : index
    %47 = vector.load %arg5[%c0_31, %c0_32] : memref<1x16xf32, #tpu.memory_space<vmem>>, vector<1x16xf32>
    %48 = vector.extract_strided_slice %38 {offsets = [15, 0], sizes = [1, 16], strides = [1, 1]} : vector<16x16xf32> to vector<1x16xf32>
    %49 = arith.addf %47, %48 : vector<1x16xf32>
    %c0_33 = arith.constant 0 : index
    %c0_34 = arith.constant 0 : index
    %50 = vector.load %arg5[%c0_33, %c0_34] : memref<1x16xf32, #tpu.memory_space<vmem>>, vector<1x16xf32>
    tpu.vector_store %arg5[%c0_33, %c0_34], %49 {strides = array<i32>} : memref<1x16xf32, #tpu.memory_space<vmem>>, vector<1x16xf32>,
    %c2 = arith.constant 2 : index
    %c0_35 = arith.constant 0 : index
    %c0_36 = arith.constant 0 : index
    %51 = vector.load %arg1[%c2, %c0_35, %c0_36] : memref<4x16x16xf32, #tpu.memory_space<vmem>>, vector<1x16x16xf32>
    %52 = vector.shape_cast %51 : vector<1x16x16xf32> to vector<16x16xf32>
    %c15_i32_37 = arith.constant 15 : i32
    %53 = tpu.dynamic_rotate %52 by %c15_i32_37 dim 1 : vector<16x16xf32>, i32 -> vector<16x16xf32>
    %54 = arith.subf %53, %52 : vector<16x16xf32>
    %cst_38 = arith.constant 9.99999997E-7 : f32
    %55 = vector.broadcast %cst_38 : f32 to vector<16x16xf32>
    %56 = arith.addf %54, %55 : vector<16x16xf32>
    %57 = math.absf %56 : vector<16x16xf32>
    %c15_i32_39 = arith.constant 15 : i32
    %58 = tpu.dynamic_rotate %52 by %c15_i32_39 dim 0 : vector<16x16xf32>, i32 -> vector<16x16xf32>
    %59 = arith.subf %58, %52 : vector<16x16xf32>
    %cst_40 = arith.constant 9.99999997E-7 : f32
    %60 = vector.broadcast %cst_40 : f32 to vector<16x16xf32>
    %61 = arith.addf %59, %60 : vector<16x16xf32>
    %62 = math.absf %61 : vector<16x16xf32>
    %c0_41 = arith.constant 0 : index
    %c0_42 = arith.constant 0 : index
    %63 = vector.load %arg3[%c0_41, %c0_42] : memref<16x16xf32, #tpu.memory_space<vmem>>, vector<16x16xf32>
    %64 = arith.addf %57, %62 : vector<16x16xf32>
    %65 = arith.addf %63, %64 : vector<16x16xf32>
    %c0_43 = arith.constant 0 : index
    %c0_44 = arith.constant 0 : index
    %66 = vector.load %arg3[%c0_43, %c0_44] : memref<16x16xf32, #tpu.memory_space<vmem>>, vector<16x16xf32>
    tpu.vector_store %arg3[%c0_43, %c0_44], %65 {strides = array<i32>} : memref<16x16xf32, #tpu.memory_space<vmem>>, vector<16x16xf32>,
    %c0_45 = arith.constant 0 : index
    %c0_46 = arith.constant 0 : index
    %67 = vector.load %arg4[%c0_45, %c0_46] : memref<16x1xf32, #tpu.memory_space<vmem>>, vector<16x1xf32>
    %68 = vector.extract_strided_slice %57 {offsets = [0, 15], sizes = [16, 1], strides = [1, 1]} : vector<16x16xf32> to vector<16x1xf32>
    %69 = arith.addf %67, %68 : vector<16x1xf32>
    %c0_47 = arith.constant 0 : index
    %c0_48 = arith.constant 0 : index
    %70 = vector.load %arg4[%c0_47, %c0_48] : memref<16x1xf32, #tpu.memory_space<vmem>>, vector<16x1xf32>
    tpu.vector_store %arg4[%c0_47, %c0_48], %69 {strides = array<i32>} : memref<16x1xf32, #tpu.memory_space<vmem>>, vector<16x1xf32>,
    %c0_49 = arith.constant 0 : index
    %c0_50 = arith.constant 0 : index
    %71 = vector.load %arg5[%c0_49, %c0_50] : memref<1x16xf32, #tpu.memory_space<vmem>>, vector<1x16xf32>
    %72 = vector.extract_strided_slice %62 {offsets = [15, 0], sizes = [1, 16], strides = [1, 1]} : vector<16x16xf32> to vector<1x16xf32>
    %73 = arith.addf %71, %72 : vector<1x16xf32>
    %c0_51 = arith.constant 0 : index
    %c0_52 = arith.constant 0 : index
    %74 = vector.load %arg5[%c0_51, %c0_52] : memref<1x16xf32, #tpu.memory_space<vmem>>, vector<1x16xf32>
    tpu.vector_store %arg5[%c0_51, %c0_52], %73 {strides = array<i32>} : memref<1x16xf32, #tpu.memory_space<vmem>>, vector<1x16xf32>,
    %c3 = arith.constant 3 : index
    %c0_53 = arith.constant 0 : index
    %c0_54 = arith.constant 0 : index
    %75 = vector.load %arg1[%c3, %c0_53, %c0_54] : memref<4x16x16xf32, #tpu.memory_space<vmem>>, vector<1x16x16xf32>
    %76 = vector.shape_cast %75 : vector<1x16x16xf32> to vector<16x16xf32>
    %c15_i32_55 = arith.constant 15 : i32
    %77 = tpu.dynamic_rotate %76 by %c15_i32_55 dim 1 : vector<16x16xf32>, i32 -> vector<16x16xf32>
    %78 = arith.subf %77, %76 : vector<16x16xf32>
    %cst_56 = arith.constant 9.99999997E-7 : f32
    %79 = vector.broadcast %cst_56 : f32 to vector<16x16xf32>
    %80 = arith.addf %78, %79 : vector<16x16xf32>
    %81 = math.absf %80 : vector<16x16xf32>
    %c15_i32_57 = arith.constant 15 : i32
    %82 = tpu.dynamic_rotate %76 by %c15_i32_57 dim 0 : vector<16x16xf32>, i32 -> vector<16x16xf32>
    %83 = arith.subf %82, %76 : vector<16x16xf32>
    %cst_58 = arith.constant 9.99999997E-7 : f32
    %84 = vector.broadcast %cst_58 : f32 to vector<16x16xf32>
    %85 = arith.addf %83, %84 : vector<16x16xf32>
    %86 = math.absf %85 : vector<16x16xf32>
    %c0_59 = arith.constant 0 : index
    %c0_60 = arith.constant 0 : index
    %87 = vector.load %arg3[%c0_59, %c0_60] : memref<16x16xf32, #tpu.memory_space<vmem>>, vector<16x16xf32>
    %88 = arith.addf %81, %86 : vector<16x16xf32>
    %89 = arith.addf %87, %88 : vector<16x16xf32>
    %c0_61 = arith.constant 0 : index
    %c0_62 = arith.constant 0 : index
    %90 = vector.load %arg3[%c0_61, %c0_62] : memref<16x16xf32, #tpu.memory_space<vmem>>, vector<16x16xf32>
    tpu.vector_store %arg3[%c0_61, %c0_62], %89 {strides = array<i32>} : memref<16x16xf32, #tpu.memory_space<vmem>>, vector<16x16xf32>,
    %c0_63 = arith.constant 0 : index
    %c0_64 = arith.constant 0 : index
    %91 = vector.load %arg4[%c0_63, %c0_64] : memref<16x1xf32, #tpu.memory_space<vmem>>, vector<16x1xf32>
    %92 = vector.extract_strided_slice %81 {offsets = [0, 15], sizes = [16, 1], strides = [1, 1]} : vector<16x16xf32> to vector<16x1xf32>
    %93 = arith.addf %91, %92 : vector<16x1xf32>
    %c0_65 = arith.constant 0 : index
    %c0_66 = arith.constant 0 : index
    %94 = vector.load %arg4[%c0_65, %c0_66] : memref<16x1xf32, #tpu.memory_space<vmem>>, vector<16x1xf32>
    tpu.vector_store %arg4[%c0_65, %c0_66], %93 {strides = array<i32>} : memref<16x1xf32, #tpu.memory_space<vmem>>, vector<16x1xf32>,
    %c0_67 = arith.constant 0 : index
    %c0_68 = arith.constant 0 : index
    %95 = vector.load %arg5[%c0_67, %c0_68] : memref<1x16xf32, #tpu.memory_space<vmem>>, vector<1x16xf32>
    %96 = vector.extract_strided_slice %86 {offsets = [15, 0], sizes = [1, 16], strides = [1, 1]} : vector<16x16xf32> to vector<1x16xf32>
    %97 = arith.addf %95, %96 : vector<1x16xf32>
    %c0_69 = arith.constant 0 : index
    %c0_70 = arith.constant 0 : index
    %98 = vector.load %arg5[%c0_69, %c0_70] : memref<1x16xf32, #tpu.memory_space<vmem>>, vector<1x16xf32>
    tpu.vector_store %arg5[%c0_69, %c0_70], %97 {strides = array<i32>} : memref<1x16xf32, #tpu.memory_space<vmem>>, vector<1x16xf32>,
    %c0_i32_71 = arith.constant 0 : i32
    %99 = arith.cmpi eq, %arg0, %c0_i32_71 : i32
    %100 = arith.extui %99 : i1 to i32
    %c0_i32_72 = arith.constant 0 : i32
    %101 = arith.cmpi ne, %100, %c0_i32_72 : i32
    scf.if %101 {
      %c0_73 = arith.constant 0 : index
      %c0_74 = arith.constant 0 : index
      %102 = vector.load %arg3[%c0_73, %c0_74] : memref<16x16xf32, #tpu.memory_space<vmem>>, vector<16x16xf32>
      %103 = vector.shape_cast %102 : vector<16x16xf32> to vector<1x16x16xf32>
      %cst_75 = arith.constant dense<0.000000e+00> : vector<1xf32>
      %104 = vector.multi_reduction <add>, %103, %cst_75 [1, 2] : vector<1x16x16xf32> to vector<1xf32>
      %105 = vector.shape_cast %104 : vector<1xf32> to vector<1x1x1xf32>
      %106 = vector.extract %105[0, 0, 0] : f32 from vector<1x1x1xf32>
      %c0_76 = arith.constant 0 : index
      %c0_77 = arith.constant 0 : index
      %107 = vector.load %arg4[%c0_76, %c0_77] : memref<16x1xf32, #tpu.memory_space<vmem>>, vector<16x1xf32>
      %108 = vector.shape_cast %107 : vector<16x1xf32> to vector<1x16x1xf32>
      %cst_78 = arith.constant dense<0.000000e+00> : vector<1xf32>
      %109 = vector.multi_reduction <add>, %108, %cst_78 [1, 2] : vector<1x16x1xf32> to vector<1xf32>
      %110 = vector.shape_cast %109 : vector<1xf32> to vector<1x1x1xf32>
      %111 = vector.extract %110[0, 0, 0] : f32 from vector<1x1x1xf32>
      %112 = arith.subf %106, %111 : f32
      %c0_79 = arith.constant 0 : index
      %c0_80 = arith.constant 0 : index
      %113 = vector.load %arg5[%c0_79, %c0_80] : memref<1x16xf32, #tpu.memory_space<vmem>>, vector<1x16xf32>
      %114 = vector.shape_cast %113 : vector<1x16xf32> to vector<1x1x16xf32>
      %cst_81 = arith.constant dense<0.000000e+00> : vector<1xf32>
      %115 = vector.multi_reduction <add>, %114, %cst_81 [1, 2] : vector<1x1x16xf32> to vector<1xf32>
      %116 = vector.shape_cast %115 : vector<1xf32> to vector<1x1x1xf32>
      %117 = vector.extract %116[0, 0, 0] : f32 from vector<1x1x1xf32>
      %118 = arith.subf %112, %117 : f32
      %cst_82 = arith.constant 1.024000e+03 : f32
      %119 = arith.divf %118, %cst_82 : f32
      %c0_83 = arith.constant 0 : index
      %c0_84 = arith.constant 0 : index
      %120 = memref.load %arg2[%c0_83, %c0_84] : memref<1x1xf32, #tpu.memory_space<smem>>
      memref.store %119, %arg2[%c0_83, %c0_84] : memref<1x1xf32, #tpu.memory_space<smem>>
    } else {
    }
    return
  }
  func.func @transform_0(%arg0: i32) -> (i32, i32, i32) {
    %c0_i32 = arith.constant 0 : i32
    %c0_i32_0 = arith.constant 0 : i32
    %c0_i32_1 = arith.constant 0 : i32
    return %arg0, %c0_i32, %c0_i32_0 : i32, i32, i32
  }
  func.func @transform_1(%arg0: i32) -> (i32, i32) {
    %c0_i32 = arith.constant 0 : i32
    %c0_i32_0 = arith.constant 0 : i32
    %c0_i32_1 = arith.constant 0 : i32
    return %c0_i32, %c0_i32_0 : i32, i32
  }
}

</mosaic_0001>

<llo_original>
// kernel: tpu_custom_call.1
$region0: #{tpu_custom_call.1}
  #allocation0 [shape = 'u32[]', space=smem, size = 0x4, offset = 0x4, fixed_abs, tag = 'smem constant byte address 0x4 - core index']
  #allocation1 [shape = 'u32[144,128]{1,0:T(1,128)}', space=vmem, size = 0x12000, scoped, tag = 'internal scratch']
  #allocation2 [shape = 'f32[16,16]{1,0:T(8,128)}', space=vmem, size = 0x2000, scoped, tag = 'scratch operand']
  #allocation3 [shape = 'f32[16,1]{1,0:T(8,128)}', space=vmem, size = 0x2000, scoped, tag = 'scratch operand']
  #allocation4 [shape = 'f32[1,16]{1,0:T(1,128)}', space=vmem, size = 0x200, scoped, tag = 'scratch operand']
  %s0 = inlined_call_operand.hbm [shape: f32[4,16,16], index: 0, kind: input, shape index: {}]
  %s1 = inlined_call_operand.hbm [shape: f32[1,1], index: 1, kind: output, shape index: {}]
  %s2 = sld [smem:[#allocation0]]
  $region26: #{tpu_custom_call.1} parent=0
    _
  %s4 = ssub.s32 1, %s2
  %s5 = scalar_select 0, %s4, %s2
  $region1: #{tpu_custom_call.1} parent=0
    #allocation5 [shape = 'u8[32768]{0}', space=vmem, size = 0x8000, scoped, tag = 'input window, operand 0, single buffered']
    #allocation6 [shape = 's32[1]{0}', space=sflag, size = 0x4, scoped, tag = 'scoped memory for tpu_custom_call.1']
    #allocation7 [shape = 's32[1]{0}', space=sflag, size = 0x4, scoped, tag = 'scoped memory for tpu_custom_call.1']
    #allocation8 [shape = 'u8[512]{0}', space=smem, size = 0x200, scoped, tag = 'output window, operand 0, single buffered']
    %6 = vsyncpa [#allocation6], 0
    %7 = vsyncpa [#allocation7], 0
    // Predicated region
    $region2: #{tpu_custom_call.1} parent=1 // pred_check
      _
    $region3: #{tpu_custom_call.1} parent=1 // pred_check_branch
      %9 = sbr.rel (0) target = $region5
    $region4: #{tpu_custom_call.1} parent=1 // pred_region
      %s11 = ssub.s32 1024, 1024
      %12 = vsyncadd [#allocation6], %s11
      %s13 = sshll.u32 [#allocation5], 4
      %s14 = int_to_ptr.vmem [resolvable:$true] %s13
      %19 = dma.hbm_to_vmem [thread:$0]  %s0, 1024, %s14, [#allocation6], 128, 128, 8
    $region5: #{tpu_custom_call.1} parent=1 // pred_fallthru
      _
    // Predicated region
    $region6: #{tpu_custom_call.1} parent=1 // pred_check
      _
    $region7: #{tpu_custom_call.1} parent=1 // pred_check_branch
      %21 = sbr.rel (0) target = $region9
    $region8: #{tpu_custom_call.1} parent=1 // pred_region
      %22 = dma.done [#allocation6], 1024
    $region9: #{tpu_custom_call.1} parent=1 // pred_fallthru
      _
    %p23 = scmp.eq.s32.totalorder 0, 0
    // Predicated region
    $region10: #{tpu_custom_call.1} parent=1 // pred_check
      %p24 = pneg %p23
    $region11: #{tpu_custom_call.1} parent=1 // pred_check_branch
      %26 = sbr.rel (%p24) target = $region13
    $region12: #{tpu_custom_call.1} parent=1 // pred_region
      %vm27 = vcmask 130048
      %28 = vst.msk [vmem:[#allocation2] sm:$0xff] %vm27, 0.0
      %29 = vst.msk [vmem:[#allocation2 + $0x8] sm:$0xff] %vm27, 0.0
      %vm30 = vcmask 7168
      %31 = vst.msk [vmem:[#allocation3] sm:$0xff] %vm30, 0.0
      %32 = vst.msk [vmem:[#allocation3 + $0x8] sm:$0xff] %vm30, 0.0
      %vm33 = vcmask 122880
      %34 = vst.msk [vmem:[#allocation4] sm:$0x1] %vm33, 0.0
    $region13: #{tpu_custom_call.1} parent=1 // pred_fallthru
      _
    %v35 = vld [vmem:[#allocation5] sm:$0xff]
    %v36 = vld [vmem:[#allocation5 + $0x8] sm:$0xff]
    %vm37 = vcmask 1047680
    %38 = vrot.lane.b32.xlu0 %v35, 16
    %v39 = vpop.permute.xlu0 %38
    %v40 = vsel %vm37, %v39, %v35
    %41 = vrot.lane.b32.xlu0 %v36, 16
    %v42 = vpop.permute.xlu0 %41
    %v43 = vsel %vm37, %v42, %v36
    %44 = vrot.lane.b32.xlu0 %v40, 16
    %v45 = vpop.permute.xlu0 %44
    %46 = vrot.lane.b32.xlu0 %v43, 16
    %v47 = vpop.permute.xlu0 %46
    %v48 = vsel %vm37, %v45, %v35
    %v49 = vsel %vm37, %v47, %v36
    %52 = vrot.lane.b32.xlu0 %v35, 1
    %v53 = vpop.permute.xlu0 %52
    %54 = vrot.lane.b32.xlu0 %v36, 1
    %v55 = vpop.permute.xlu0 %54
    %v58 = vsub.f32 %v48, %v53
    %v59 = vsub.f32 %v49, %v55
    %v60 = vadd.f32 %v58, 1e-06
    %v61 = vadd.f32 %v59, 1e-06
    %v62 = vand.u32 2147483647, %v60
    %v63 = vand.u32 2147483647, %v61
    %v64 = vrot.slane %v35, 1
    %v65 = vrot.slane %v36, 1
    %v66 = vlaneseq
    %v67 = vshrl.u32 %v66, 7
    %vm68 = vcmp.lt.s32.totalorder %v67, 7
    %v69 = vsel %vm68, %v64, %v65
    %v70 = vsel %vm68, %v65, %v64
    %v71 = vsub.f32 %v69, %v35
    %v72 = vsub.f32 %v70, %v36
    %v73 = vadd.f32 %v71, 1e-06
    %v74 = vadd.f32 %v72, 1e-06
    %v75 = vand.u32 2147483647, %v73
    %v76 = vand.u32 2147483647, %v74
    %v77 = vld [vmem:[#allocation2] sm:$0xff]
    %v78 = vld [vmem:[#allocation2 + $0x8] sm:$0xff]
    %81 = vrot.lane.b32.xlu0 %v75, 1
    %v82 = vpop.permute.xlu0 %81
    %83 = vrot.lane.b32.xlu0 %v76, 1
    %v84 = vpop.permute.xlu0 %83
    %v87 = vadd.f32 %v62, %v82
    %v88 = vadd.f32 %v63, %v84
    %91 = vrot.lane.b32.xlu0 %v87, 127
    %v92 = vpop.permute.xlu0 %91
    %93 = vrot.lane.b32.xlu0 %v88, 127
    %v94 = vpop.permute.xlu0 %93
    %v97 = vadd.f32 %v77, %v92
    %v98 = vadd.f32 %v78, %v94
    %vm99 = vcmask 130048
    %100 = vst.msk [vmem:[#allocation2] sm:$0xff] %vm99, %v97
    %101 = vst.msk [vmem:[#allocation2 + $0x8] sm:$0xff] %vm99, %v98
    %v102 = vld [vmem:[#allocation3] sm:$0xff]
    %v103 = vld [vmem:[#allocation3 + $0x8] sm:$0xff]
    %106 = vrot.lane.b32.xlu0 %v62, 112
    %v107 = vpop.permute.xlu0 %106
    %108 = vrot.lane.b32.xlu0 %v63, 112
    %v109 = vpop.permute.xlu0 %108
    %v112 = vadd.f32 %v102, %v107
    %v113 = vadd.f32 %v103, %v109
    %vm114 = vcmask 7168
    %115 = vst.msk [vmem:[#allocation3] sm:$0xff] %vm114, %v112
    %116 = vst.msk [vmem:[#allocation3 + $0x8] sm:$0xff] %vm114, %v113
    %v117 = vld [vmem:[#allocation4] sm:$0x1]
    %v118 = vcombine.high %v76, %v76
    %v120 = vunpack.c.l.s4 1966171168
    %v121 = vunpack.c.0.s8 %v120
    %v122 = vlaneseq
    %v123 = vshrl.u32 %v122, 7
    %v124 = vsub.s32 %v121, %v123
    %v125 = vrot.slane %v118, %v124
    %v126 = vcombine.high %v125, %v125
    %v128 = vunpack.c.l.s4 1966171168
    %v129 = vunpack.c.0.s8 %v128
    %v130 = vlaneseq
    %v131 = vshrl.u32 %v130, 7
    %v132 = vsub.s32 %v129, %v131
    %v133 = vrot.slane %v126, %v132
    %v134 = vcombine.high %v133, %v133
    %v136 = vadd.f32 %v117, %v134
    %vm137 = vcmask 122880
    %138 = vst.msk [vmem:[#allocation4] sm:$0x1] %vm137, %v136
    %s139 = scalar_lea.vmem [#allocation5], 16
    %v140 = vld [vmem:[%s139] sm:$0xff]
    %v141 = vld [vmem:[%s139 + $0x8] sm:$0xff]
    %142 = vrot.lane.b32.xlu0 %v140, 16
    %v143 = vpop.permute.xlu0 %142
    %v144 = vsel %vm37, %v143, %v140
    %145 = vrot.lane.b32.xlu0 %v141, 16
    %v146 = vpop.permute.xlu0 %145
    %v147 = vsel %vm37, %v146, %v141
    %148 = vrot.lane.b32.xlu0 %v144, 16
    %v149 = vpop.permute.xlu0 %148
    %150 = vrot.lane.b32.xlu0 %v147, 16
    %v151 = vpop.permute.xlu0 %150
    %v152 = vsel %vm37, %v149, %v140
    %v153 = vsel %vm37, %v151, %v141
    %156 = vrot.lane.b32.xlu0 %v140, 1
    %v157 = vpop.permute.xlu0 %156
    %158 = vrot.lane.b32.xlu0 %v141, 1
    %v159 = vpop.permute.xlu0 %158
    %v162 = vsub.f32 %v152, %v157
    %v163 = vsub.f32 %v153, %v159
    %v164 = vadd.f32 %v162, 1e-06
    %v165 = vadd.f32 %v163, 1e-06
    %v166 = vand.u32 2147483647, %v164
    %v167 = vand.u32 2147483647, %v165
    %v168 = vrot.slane %v140, 1
    %v169 = vrot.slane %v141, 1
    %v170 = vsel %vm68, %v168, %v169
    %v171 = vsel %vm68, %v169, %v168
    %v172 = vsub.f32 %v170, %v140
    %v173 = vsub.f32 %v171, %v141
    %v174 = vadd.f32 %v172, 1e-06
    %v175 = vadd.f32 %v173, 1e-06
    %v176 = vand.u32 2147483647, %v174
    %v177 = vand.u32 2147483647, %v175
    %v178 = vld [vmem:[#allocation2] sm:$0xff]
    %v179 = vld [vmem:[#allocation2 + $0x8] sm:$0xff]
    %182 = vrot.lane.b32.xlu0 %v176, 1
    %v183 = vpop.permute.xlu0 %182
    %184 = vrot.lane.b32.xlu0 %v177, 1
    %v185 = vpop.permute.xlu0 %184
    %v188 = vadd.f32 %v166, %v183
    %v189 = vadd.f32 %v167, %v185
    %192 = vrot.lane.b32.xlu0 %v188, 127
    %v193 = vpop.permute.xlu0 %192
    %194 = vrot.lane.b32.xlu0 %v189, 127
    %v195 = vpop.permute.xlu0 %194
    %v198 = vadd.f32 %v178, %v193
    %v199 = vadd.f32 %v179, %v195
    %200 = vst.msk [vmem:[#allocation2] sm:$0xff] %vm99, %v198
    %201 = vst.msk [vmem:[#allocation2 + $0x8] sm:$0xff] %vm99, %v199
    %v202 = vld [vmem:[#allocation3] sm:$0xff]
    %v203 = vld [vmem:[#allocation3 + $0x8] sm:$0xff]
    %206 = vrot.lane.b32.xlu0 %v166, 112
    %v207 = vpop.permute.xlu0 %206
    %208 = vrot.lane.b32.xlu0 %v167, 112
    %v209 = vpop.permute.xlu0 %208
    %v212 = vadd.f32 %v202, %v207
    %v213 = vadd.f32 %v203, %v209
    %214 = vst.msk [vmem:[#allocation3] sm:$0xff] %vm114, %v212
    %215 = vst.msk [vmem:[#allocation3 + $0x8] sm:$0xff] %vm114, %v213
    %v216 = vld [vmem:[#allocation4] sm:$0x1]
    %v217 = vcombine.high %v177, %v177
    %v219 = vunpack.c.l.s4 1966171168
    %v220 = vunpack.c.0.s8 %v219
    %v221 = vlaneseq
    %v222 = vshrl.u32 %v221, 7
    %v223 = vsub.s32 %v220, %v222
    %v224 = vrot.slane %v217, %v223
    %v225 = vcombine.high %v224, %v224
    %v227 = vunpack.c.l.s4 1966171168
    %v228 = vunpack.c.0.s8 %v227
    %v229 = vlaneseq
    %v230 = vshrl.u32 %v229, 7
    %v231 = vsub.s32 %v228, %v230
    %v232 = vrot.slane %v225, %v231
    %v233 = vcombine.high %v232, %v232
    %v235 = vadd.f32 %v216, %v233
    %236 = vst.msk [vmem:[#allocation4] sm:$0x1] %vm137, %v235
    %s237 = scalar_lea.vmem [#allocation5], 32
    %v238 = vld [vmem:[%s237] sm:$0xff]
    %v239 = vld [vmem:[%s237 + $0x8] sm:$0xff]
    %240 = vrot.lane.b32.xlu0 %v238, 16
    %v241 = vpop.permute.xlu0 %240
    %v242 = vsel %vm37, %v241, %v238
    %243 = vrot.lane.b32.xlu0 %v239, 16
    %v244 = vpop.permute.xlu0 %243
    %v245 = vsel %vm37, %v244, %v239
    %246 = vrot.lane.b32.xlu0 %v242, 16
    %v247 = vpop.permute.xlu0 %246
    %248 = vrot.lane.b32.xlu0 %v245, 16
    %v249 = vpop.permute.xlu0 %248
    %v250 = vsel %vm37, %v247, %v238
    %v251 = vsel %vm37, %v249, %v239
    %254 = vrot.lane.b32.xlu0 %v238, 1
    %v255 = vpop.permute.xlu0 %254
    %256 = vrot.lane.b32.xlu0 %v239, 1
    %v257 = vpop.permute.xlu0 %256
    %v260 = vsub.f32 %v250, %v255
    %v261 = vsub.f32 %v251, %v257
    %v262 = vadd.f32 %v260, 1e-06
    %v263 = vadd.f32 %v261, 1e-06
    %v264 = vand.u32 2147483647, %v262
    %v265 = vand.u32 2147483647, %v263
    %v266 = vrot.slane %v238, 1
    %v267 = vrot.slane %v239, 1
    %v268 = vsel %vm68, %v266, %v267
    %v269 = vsel %vm68, %v267, %v266
    %v270 = vsub.f32 %v268, %v238
    %v271 = vsub.f32 %v269, %v239
    %v272 = vadd.f32 %v270, 1e-06
    %v273 = vadd.f32 %v271, 1e-06
    %v274 = vand.u32 2147483647, %v272
    %v275 = vand.u32 2147483647, %v273
    %v276 = vld [vmem:[#allocation2] sm:$0xff]
    %v277 = vld [vmem:[#allocation2 + $0x8] sm:$0xff]
    %280 = vrot.lane.b32.xlu0 %v274, 1
    %v281 = vpop.permute.xlu0 %280
    %282 = vrot.lane.b32.xlu0 %v275, 1
    %v283 = vpop.permute.xlu0 %282
    %v286 = vadd.f32 %v264, %v281
    %v287 = vadd.f32 %v265, %v283
    %290 = vrot.lane.b32.xlu0 %v286, 127
    %v291 = vpop.permute.xlu0 %290
    %292 = vrot.lane.b32.xlu0 %v287, 127
    %v293 = vpop.permute.xlu0 %292
    %v296 = vadd.f32 %v276, %v291
    %v297 = vadd.f32 %v277, %v293
    %298 = vst.msk [vmem:[#allocation2] sm:$0xff] %vm99, %v296
    %299 = vst.msk [vmem:[#allocation2 + $0x8] sm:$0xff] %vm99, %v297
    %v300 = vld [vmem:[#allocation3] sm:$0xff]
    %v301 = vld [vmem:[#allocation3 + $0x8] sm:$0xff]
    %304 = vrot.lane.b32.xlu0 %v264, 112
    %v305 = vpop.permute.xlu0 %304
    %306 = vrot.lane.b32.xlu0 %v265, 112
    %v307 = vpop.permute.xlu0 %306
    %v310 = vadd.f32 %v300, %v305
    %v311 = vadd.f32 %v301, %v307
    %312 = vst.msk [vmem:[#allocation3] sm:$0xff] %vm114, %v310
    %313 = vst.msk [vmem:[#allocation3 + $0x8] sm:$0xff] %vm114, %v311
    %v314 = vld [vmem:[#allocation4] sm:$0x1]
    %v315 = vcombine.high %v275, %v275
    %v317 = vunpack.c.l.s4 1966171168
    %v318 = vunpack.c.0.s8 %v317
    %v319 = vlaneseq
    %v320 = vshrl.u32 %v319, 7
    %v321 = vsub.s32 %v318, %v320
    %v322 = vrot.slane %v315, %v321
    %v323 = vcombine.high %v322, %v322
    %v325 = vunpack.c.l.s4 1966171168
    %v326 = vunpack.c.0.s8 %v325
    %v327 = vlaneseq
    %v328 = vshrl.u32 %v327, 7
    %v329 = vsub.s32 %v326, %v328
    %v330 = vrot.slane %v323, %v329
    %v331 = vcombine.high %v330, %v330
    %v333 = vadd.f32 %v314, %v331
    %334 = vst.msk [vmem:[#allocation4] sm:$0x1] %vm137, %v333
    %s335 = scalar_lea.vmem [#allocation5], 48
    %v336 = vld [vmem:[%s335] sm:$0xff]
    %v337 = vld [vmem:[%s335 + $0x8] sm:$0xff]
    %338 = vrot.lane.b32.xlu0 %v336, 16
    %v339 = vpop.permute.xlu0 %338
    %v340 = vsel %vm37, %v339, %v336
    %341 = vrot.lane.b32.xlu0 %v337, 16
    %v342 = vpop.permute.xlu0 %341
    %v343 = vsel %vm37, %v342, %v337
    %344 = vrot.lane.b32.xlu0 %v340, 16
    %v345 = vpop.permute.xlu0 %344
    %346 = vrot.lane.b32.xlu0 %v343, 16
    %v347 = vpop.permute.xlu0 %346
    %v348 = vsel %vm37, %v345, %v336
    %v349 = vsel %vm37, %v347, %v337
    %352 = vrot.lane.b32.xlu0 %v336, 1
    %v353 = vpop.permute.xlu0 %352
    %354 = vrot.lane.b32.xlu0 %v337, 1
    %v355 = vpop.permute.xlu0 %354
    %v358 = vsub.f32 %v348, %v353
    %v359 = vsub.f32 %v349, %v355
    %v360 = vadd.f32 %v358, 1e-06
    %v361 = vadd.f32 %v359, 1e-06
    %v362 = vand.u32 2147483647, %v360
    %v363 = vand.u32 2147483647, %v361
    %v364 = vrot.slane %v336, 1
    %v365 = vrot.slane %v337, 1
    %v366 = vsel %vm68, %v364, %v365
    %v367 = vsel %vm68, %v365, %v364
    %v368 = vsub.f32 %v366, %v336
    %v369 = vsub.f32 %v367, %v337
    %v370 = vadd.f32 %v368, 1e-06
    %v371 = vadd.f32 %v369, 1e-06
    %v372 = vand.u32 2147483647, %v370
    %v373 = vand.u32 2147483647, %v371
    %v374 = vld [vmem:[#allocation2] sm:$0xff]
    %v375 = vld [vmem:[#allocation2 + $0x8] sm:$0xff]
    %378 = vrot.lane.b32.xlu0 %v372, 1
    %v379 = vpop.permute.xlu0 %378
    %380 = vrot.lane.b32.xlu0 %v373, 1
    %v381 = vpop.permute.xlu0 %380
    %v384 = vadd.f32 %v362, %v379
    %v385 = vadd.f32 %v363, %v381
    %388 = vrot.lane.b32.xlu0 %v384, 127
    %v389 = vpop.permute.xlu0 %388
    %390 = vrot.lane.b32.xlu0 %v385, 127
    %v391 = vpop.permute.xlu0 %390
    %v394 = vadd.f32 %v374, %v389
    %v395 = vadd.f32 %v375, %v391
    %396 = vst.msk [vmem:[#allocation2] sm:$0xff] %vm99, %v394
    %397 = vst.msk [vmem:[#allocation2 + $0x8] sm:$0xff] %vm99, %v395
    %v398 = vld [vmem:[#allocation3] sm:$0xff]
    %v399 = vld [vmem:[#allocation3 + $0x8] sm:$0xff]
    %402 = vrot.lane.b32.xlu0 %v362, 112
    %v403 = vpop.permute.xlu0 %402
    %404 = vrot.lane.b32.xlu0 %v363, 112
    %v405 = vpop.permute.xlu0 %404
    %v408 = vadd.f32 %v398, %v403
    %v409 = vadd.f32 %v399, %v405
    %410 = vst.msk [vmem:[#allocation3] sm:$0xff] %vm114, %v408
    %411 = vst.msk [vmem:[#allocation3 + $0x8] sm:$0xff] %vm114, %v409
    %v412 = vld [vmem:[#allocation4] sm:$0x1]
    %v413 = vcombine.high %v373, %v373
    %v415 = vunpack.c.l.s4 1966171168
    %v416 = vunpack.c.0.s8 %v415
    %v417 = vlaneseq
    %v418 = vshrl.u32 %v417, 7
    %v419 = vsub.s32 %v416, %v418
    %v420 = vrot.slane %v413, %v419
    %v421 = vcombine.high %v420, %v420
    %v423 = vunpack.c.l.s4 1966171168
    %v424 = vunpack.c.0.s8 %v423
    %v425 = vlaneseq
    %v426 = vshrl.u32 %v425, 7
    %v427 = vsub.s32 %v424, %v426
    %v428 = vrot.slane %v421, %v427
    %v429 = vcombine.high %v428, %v428
    %v431 = vadd.f32 %v412, %v429
    %432 = vst.msk [vmem:[#allocation4] sm:$0x1] %vm137, %v431
    // Predicated region
    $region14: #{tpu_custom_call.1} parent=1 // pred_check
      %p433 = pneg %p23
    $region15: #{tpu_custom_call.1} parent=1 // pred_check_branch
      %435 = sbr.rel (%p433) target = $region17
    $region16: #{tpu_custom_call.1} parent=1 // pred_region
      %v436 = vld [vmem:[#allocation2] sm:$0xff]
      %v437 = vld [vmem:[#allocation2 + $0x8] sm:$0xff]
      %v438 = vsel %vm99, %v436, 0.0
      %v439 = vsel %vm99, %v437, 0.0
      %v440 = vadd.f32 %v438, %v439
      %441 = vadd.xlane.f32.xlu0 %v440
      %v442 = vpop.xlane.xlu0 %441
      %v443 = vrot.slane %v442, 4
      %v444 = vadd.f32 %v442, %v443
      %v445 = vrot.slane %v444, 2
      %v446 = vadd.f32 %v444, %v445
      %v447 = vrot.slane %v446, 1
      %v448 = vadd.f32 %v446, %v447
      %s449 = vtos %v448
      %v450 = vld [vmem:[#allocation3] sm:$0xff]
      %v451 = vld [vmem:[#allocation3 + $0x8] sm:$0xff]
      %v452 = vsel %vm114, %v450, 0.0
      %v453 = vsel %vm114, %v451, 0.0
      %v454 = vadd.f32 %v452, %v453
      %455 = vadd.xlane.f32.xlu0 %v454
      %v456 = vpop.xlane.xlu0 %455
      %v457 = vrot.slane %v456, 4
      %v458 = vadd.f32 %v456, %v457
      %v459 = vrot.slane %v458, 2
      %v460 = vadd.f32 %v458, %v459
      %v461 = vrot.slane %v460, 1
      %v462 = vadd.f32 %v460, %v461
      %s463 = vtos %v462
      %s464 = ssub.f32 %s449, %s463
      %v465 = vld [vmem:[#allocation4] sm:$0x1]
      %v466 = vsel %vm137, %v465, 0.0
      %467 = vadd.xlane.f32.xlu0 %v466
      %v468 = vpop.xlane.xlu0 %467
      %v469 = vrot.slane %v468, 4
      %v470 = vadd.f32 %v468, %v469
      %v471 = vrot.slane %v470, 2
      %v472 = vadd.f32 %v470, %v471
      %v473 = vrot.slane %v472, 1
      %v474 = vadd.f32 %v472, %v473
      %s475 = vtos %v474
      %s476 = ssub.f32 %s464, %s475
      %v477 = vrcp.pop 1024.0
      %s478 = vtos %v477
      %s479 = smul.f32 %s476, %s478
      %s480 = scalar_lea.smem [#allocation8], 0
      %481 = sst [smem:[%s480]] %s479
    $region17: #{tpu_custom_call.1} parent=1 // pred_fallthru
      _
    // Predicated region
    $region18: #{tpu_custom_call.1} parent=1 // pred_check
      _
    $region19: #{tpu_custom_call.1} parent=1 // pred_check_branch
      %483 = sbr.rel (0) target = $region21
    $region20: #{tpu_custom_call.1} parent=1 // pred_region
      %s485 = ssub.s32 16, 16
      %486 = vsyncadd [#allocation7], %s485
      %489 = dma.smem_to_hbm [#allocation8], 16, %s1, [#allocation7]
    $region21: #{tpu_custom_call.1} parent=1 // pred_fallthru
      _
    // Predicated region
    $region22: #{tpu_custom_call.1} parent=1 // pred_check
      _
    $region23: #{tpu_custom_call.1} parent=1 // pred_check_branch
      %491 = sbr.rel (0) target = $region25
    $region24: #{tpu_custom_call.1} parent=1 // pred_region
      %492 = dma.done [#allocation7], 16
    $region25: #{tpu_custom_call.1} parent=1 // pred_fallthru
      _
    %493 = sfence
    %494 = vsyncpa [#allocation6], 1
    %495 = vsyncpa [#allocation7], 1

</llo_original>
